<compile_context>
chip_gen: v5e
topology: v5e:2x2
jax: 0.10.0
libtpu: 0.0.40
codegen_flags: <defaults>
</compile_context>

<pallas_src>
import jax
import jax.numpy as jnp
from jax import lax
from jax.experimental import pallas as pl
from jax.experimental.pallas import tpu as pltpu

# ----------------------------- model config ---------------------------------
BATCH = 2
SEQ = 8
IN_FEAT = 256    # C1 (input_feat_size)  -- lane-dense (2 * 128)
OUT_FEAT = 128   # C2 (output_feat_size) -- lane-dense (1 * 128)
LN_EPS = 1e-12   # matches nn.LayerNorm(output_feat_size, eps=1e-12)

# Row tile cap: safe on all generations (v7x: 64 MiB VMEM / 32 MiB scoped
# default). >=512-row tiles already hit ~85% of HBM roofline, so larger tiles
# buy little; v5e/v6e could go 2048-4096 but 1024 keeps one code path.
TILE_N_MAX = 1024


def _round_up(x: int, m: int) -> int:
    return (x + m - 1) // m * m


# --------------------------- Pallas kernel -----------------------------------
def _make_feature_resizer_kernel(do_ln: bool):
    def kernel(x_ref, w_ref, b_ref, g_ref, beta_ref, o_ref):
        # x:(TILE_N,C1)  w:(C1,C2) bf16 (resident)  b/g/beta:(1,C2) f32  o:(TILE_N,C2)
        x = x_ref[...]                      # no pre-cast: bf16 feeds the MXU natively
        w = w_ref[...]
        if x.dtype != w.dtype:              # f32 activations: upcast the small resident
            w = w.astype(x.dtype)           # weight tile (cheap, per grid step)
        y = jnp.dot(x, w, preferred_element_type=jnp.float32) + b_ref[...]
        if do_ln:
            mu = jnp.mean(y, axis=-1, keepdims=True)
            # two-pass variance: (y-mu)^2 can't round negative (eps is only 1e-12)
            var = jnp.mean((y - mu) ** 2, axis=-1, keepdims=True)
            scale = lax.rsqrt(var + LN_EPS) * g_ref[...]      # fold gamma into the scale
            y = (y - mu) * scale + beta_ref[...]
        o_ref[...] = y.astype(o_ref.dtype)

    return kernel


# ------------------------------ wrapper ---------------------------------------
def feature_resizer_forward(encoder_features, w_t, bias, ln_gamma, ln_beta,
                            *, do_ln=True):
    """encoder_features: (..., C1).  w_t: (C1, C2) == PyTorch fc.weight.T."""
    orig_shape = encoder_features.shape
    c1 = orig_shape[-1]
    c2 = w_t.shape[1]
    n = encoder_features.size // c1

    # free layout plumbing: flatten leading dims -> lane-dense (N, C1) slab
    x2 = encoder_features.reshape(n, c1)

    # Row tile: multiple of 8 (f32 sublanes), capped for scoped-VMEM headroom.
    tile_n = min(_round_up(n, 8), TILE_N_MAX)
    n_pad = _round_up(n, tile_n)
    if n_pad != n:
        x2 = jnp.pad(x2, ((0, n_pad - n), (0, 0)))
    grid = (n_pad // tile_n,)

    # bf16 weight halves the dominant HBM transfer; MXU is bf16-native with f32
    # accumulate on v5e/v6e/v7x.  Small per-channel params stay f32.
    w16 = w_t.astype(jnp.bfloat16)
    b2 = bias.reshape(1, c2).astype(jnp.float32)
    g2 = ln_gamma.reshape(1, c2).astype(jnp.float32)
    be2 = ln_beta.reshape(1, c2).astype(jnp.float32)

    itemsize = jnp.dtype(encoder_features.dtype).itemsize
    cost = pl.CostEstimate(
        flops=2 * n_pad * c1 * c2 + 8 * n_pad * c2,       # matmul + LN elementwise
        bytes_accessed=(n_pad * c1 * itemsize             # activations in
                        + c1 * c2 * 2                     # bf16 weight
                        + 3 * c2 * 4                      # bias/gamma/beta
                        + n_pad * c2 * itemsize),         # output
        transcendentals=0,
    )

    out2 = pl.pallas_call(
        _make_feature_resizer_kernel(do_ln),
        out_shape=jax.ShapeDtypeStruct((n_pad, c2), encoder_features.dtype),
        grid=grid,
        in_specs=[
            pl.BlockSpec((tile_n, c1), lambda i: (i, 0)),   # activations, row-tiled
            pl.BlockSpec((c1, c2), lambda i: (0, 0)),       # weight, VMEM-resident
            pl.BlockSpec((1, c2), lambda i: (0, 0)),        # bias
            pl.BlockSpec((1, c2), lambda i: (0, 0)),        # LN gamma
            pl.BlockSpec((1, c2), lambda i: (0, 0)),        # LN beta
        ],
        out_specs=pl.BlockSpec((tile_n, c2), lambda i: (i, 0)),
        compiler_params=pltpu.CompilerParams(
            dimension_semantics=("parallel",)),             # megacore on v7x
        cost_estimate=cost,
    )(x2, w16, b2, g2, be2)

    if n_pad != n:
        out2 = out2[:n]
    return out2.reshape(orig_shape[:-1] + (c2,))


# ------------------------- pure-JAX reference ---------------------------------
def reference_forward(encoder_features, w_t, bias, ln_gamma, ln_beta, *, do_ln=True):
    # Use the same bf16-quantized weight the kernel uses; math in f32.
    w = w_t.astype(jnp.bfloat16).astype(jnp.float32)
    x = encoder_features.astype(jnp.float32)
    y = jnp.dot(x, w, precision=lax.Precision.HIGHEST) + bias.astype(jnp.float32)
    if do_ln:
        mu = jnp.mean(y, axis=-1, keepdims=True)
        var = jnp.mean((y - mu) ** 2, axis=-1, keepdims=True)
        y = (y - mu) * lax.rsqrt(var + LN_EPS) * ln_gamma + ln_beta
    return y.astype(encoder_features.dtype)  # dropout: inference no-op


# ---------------------------------- main ---------------------------------------
if __name__ == "__main__":
    key = jax.random.PRNGKey(0)
    k_x, k_w, k_b, k_g, k_be = jax.random.split(key, 5)

    # encoder_features: (batch, seq, C1), like text-encoder outputs fed to MDETR
    x = jax.random.normal(k_x, (BATCH, SEQ, IN_FEAT), jnp.float32)

    # PyTorch nn.Linear weight is (C2, C1); store its transpose so x @ W_t + b
    # reproduces F.linear exactly.
    w_pt = 0.02 * jax.random.normal(k_w, (OUT_FEAT, IN_FEAT), jnp.float32)
    w_t = jnp.transpose(w_pt)                               # (C1, C2)
    bias = 0.01 * jax.random.normal(k_b, (OUT_FEAT,), jnp.float32)
    ln_gamma = 1.0 + 0.05 * jax.random.normal(k_g, (OUT_FEAT,), jnp.float32)
    ln_beta = 0.05 * jax.random.normal(k_be, (OUT_FEAT,), jnp.float32)

    # f32 activations, LN on
    out = jax.block_until_ready(
        feature_resizer_forward(x, w_t, bias, ln_gamma, ln_beta, do_ln=True))
    ref = reference_forward(x, w_t, bias, ln_gamma, ln_beta, do_ln=True)
    assert out.shape == (BATCH, SEQ, OUT_FEAT)
    assert jnp.allclose(out, ref, atol=5e-3, rtol=5e-3), "mismatch (f32, do_ln=True)"

    # f32 activations, LN off (Linear only)
    out_no_ln = jax.block_until_ready(
        feature_resizer_forward(x, w_t, bias, ln_gamma, ln_beta, do_ln=False))
    ref_no_ln = reference_forward(x, w_t, bias, ln_gamma, ln_beta, do_ln=False)
    assert jnp.allclose(out_no_ln, ref_no_ln, atol=5e-3, rtol=5e-3), \
        "mismatch (f32, do_ln=False)"

    # bf16 activations exercise the native bf16 MXU path (no upcast in-kernel)
    x_bf16 = x.astype(jnp.bfloat16)
    out_bf16 = jax.block_until_ready(
        feature_resizer_forward(x_bf16, w_t, bias, ln_gamma, ln_beta, do_ln=True))
    ref_bf16 = reference_forward(x_bf16, w_t, bias, ln_gamma, ln_beta, do_ln=True)
    assert jnp.allclose(out_bf16.astype(jnp.float32), ref_bf16.astype(jnp.float32),
                        atol=5e-2, rtol=5e-2), "mismatch (bf16, do_ln=True)"

    print("KERNEL_OK")
</pallas_src>

<mosaic_0001>
module attributes {stable_mosaic.version = 11 : i64} {
  func.func @kernel(%arg0: i32, %arg1: memref<16x256xf32, #tpu.memory_space<vmem>>, %arg2: memref<256x128xbf16, #tpu.memory_space<vmem>>, %arg3: memref<1x128xf32, #tpu.memory_space<vmem>>, %arg4: memref<1x128xf32, #tpu.memory_space<vmem>>, %arg5: memref<1x128xf32, #tpu.memory_space<vmem>>, %arg6: memref<16x128xf32, #tpu.memory_space<vmem>>) attributes {dimension_semantics = [#tpu.dimension_semantics<parallel>], iteration_bounds = array<i64: 1>, scalar_prefetch = 0 : i64, scratch_operands = 0 : i64, tpu.core_type = #tpu.core_type<tc>, window_params = [{transform_indices = @transform_0, window_bounds = array<i64: 16, 256>}, {pipeline_mode = #tpu.pipeline_mode<synchronous>, transform_indices = @transform_1, window_bounds = array<i64: 256, 128>}, {pipeline_mode = #tpu.pipeline_mode<synchronous>, transform_indices = @transform_2, window_bounds = array<i64: 1, 128>}, {pipeline_mode = #tpu.pipeline_mode<synchronous>, transform_indices = @transform_3, window_bounds = array<i64: 1, 128>}, {pipeline_mode = #tpu.pipeline_mode<synchronous>, transform_indices = @transform_4, window_bounds = array<i64: 1, 128>}, {transform_indices = @transform_5, window_bounds = array<i64: 16, 128>}]} {
    %c0 = arith.constant 0 : index
    %c0_0 = arith.constant 0 : index
    %0 = vector.load %arg1[%c0, %c0_0] : memref<16x256xf32, #tpu.memory_space<vmem>>, vector<16x256xf32>
    %c0_1 = arith.constant 0 : index
    %c0_2 = arith.constant 0 : index
    %1 = vector.load %arg2[%c0_1, %c0_2] : memref<256x128xbf16, #tpu.memory_space<vmem>>, vector<256x128xbf16>
    %2 = arith.extf %1 : vector<256x128xbf16> to vector<256x128xf32>
    %cst = arith.constant dense<0.000000e+00> : vector<16x128xf32>
    %3 = tpu.matmul %0, %2, %cst {dimension_numbers = #tpu.dot_dimension_numbers<[1], [0], [0], [1], [0, 0, 1, 1], [], []>} : vector<16x256xf32>, vector<256x128xf32>, vector<16x128xf32> -> vector<16x128xf32>
    %c0_3 = arith.constant 0 : index
    %c0_4 = arith.constant 0 : index
    %4 = vector.load %arg3[%c0_3, %c0_4] : memref<1x128xf32, #tpu.memory_space<vmem>>, vector<1x128xf32>
    %5 = vector.broadcast %4 : vector<1x128xf32> to vector<16x128xf32>
    %6 = arith.addf %3, %5 : vector<16x128xf32>
    %cst_5 = arith.constant dense<0.000000e+00> : vector<16xf32>
    %7 = vector.multi_reduction <add>, %6, %cst_5 [1] : vector<16x128xf32> to vector<16xf32>
    %8 = vector.shape_cast %7 : vector<16xf32> to vector<16x1xf32>
    %cst_6 = arith.constant 1.280000e+02 : f32
    %9 = vector.broadcast %cst_6 : f32 to vector<16x1xf32>
    %10 = arith.divf %8, %9 : vector<16x1xf32>
    %11 = vector.broadcast %10 : vector<16x1xf32> to vector<16x128xf32>
    %12 = arith.subf %6, %11 : vector<16x128xf32>
    %13 = arith.mulf %12, %12 : vector<16x128xf32>
    %cst_7 = arith.constant dense<0.000000e+00> : vector<16xf32>
    %14 = vector.multi_reduction <add>, %13, %cst_7 [1] : vector<16x128xf32> to vector<16xf32>
    %15 = vector.shape_cast %14 : vector<16xf32> to vector<16x1xf32>
    %cst_8 = arith.constant 1.280000e+02 : f32
    %16 = vector.broadcast %cst_8 : f32 to vector<16x1xf32>
    %17 = arith.divf %15, %16 : vector<16x1xf32>
    %cst_9 = arith.constant 9.99999996E-13 : f32
    %18 = vector.broadcast %cst_9 : f32 to vector<16x1xf32>
    %19 = arith.addf %17, %18 : vector<16x1xf32>
    %20 = math.rsqrt %19 : vector<16x1xf32>
    %c0_10 = arith.constant 0 : index
    %c0_11 = arith.constant 0 : index
    %21 = vector.load %arg4[%c0_10, %c0_11] : memref<1x128xf32, #tpu.memory_space<vmem>>, vector<1x128xf32>
    %22 = vector.broadcast %20 : vector<16x1xf32> to vector<16x128xf32>
    %23 = vector.broadcast %21 : vector<1x128xf32> to vector<16x128xf32>
    %24 = arith.mulf %22, %23 : vector<16x128xf32>
    %25 = vector.broadcast %10 : vector<16x1xf32> to vector<16x128xf32>
    %26 = arith.subf %6, %25 : vector<16x128xf32>
    %27 = arith.mulf %26, %24 : vector<16x128xf32>
    %c0_12 = arith.constant 0 : index
    %c0_13 = arith.constant 0 : index
    %28 = vector.load %arg5[%c0_12, %c0_13] : memref<1x128xf32, #tpu.memory_space<vmem>>, vector<1x128xf32>
    %29 = vector.broadcast %28 : vector<1x128xf32> to vector<16x128xf32>
    %30 = arith.addf %27, %29 : vector<16x128xf32>
    %c0_14 = arith.constant 0 : index
    %c0_15 = arith.constant 0 : index
    %31 = vector.load %arg6[%c0_14, %c0_15] : memref<16x128xf32, #tpu.memory_space<vmem>>, vector<16x128xf32>
    tpu.vector_store %arg6[%c0_14, %c0_15], %30 {strides = array<i32>} : memref<16x128xf32, #tpu.memory_space<vmem>>, vector<16x128xf32>,
    return
  }
  func.func @transform_0(%arg0: i32) -> (i32, i32) {
    %c0_i32 = arith.constant 0 : i32
    %c0_i32_0 = arith.constant 0 : i32
    return %arg0, %c0_i32 : i32, i32
  }
  func.func @transform_1(%arg0: i32) -> (i32, i32) {
    %c0_i32 = arith.constant 0 : i32
    %c0_i32_0 = arith.constant 0 : i32
    %c0_i32_1 = arith.constant 0 : i32
    return %c0_i32, %c0_i32_0 : i32, i32
  }
  func.func @transform_2(%arg0: i32) -> (i32, i32) {
    %c0_i32 = arith.constant 0 : i32
    %c0_i32_0 = arith.constant 0 : i32
    %c0_i32_1 = arith.constant 0 : i32
    return %c0_i32, %c0_i32_0 : i32, i32
  }
  func.func @transform_3(%arg0: i32) -> (i32, i32) {
    %c0_i32 = arith.constant 0 : i32
    %c0_i32_0 = arith.constant 0 : i32
    %c0_i32_1 = arith.constant 0 : i32
    return %c0_i32, %c0_i32_0 : i32, i32
  }
  func.func @transform_4(%arg0: i32) -> (i32, i32) {
    %c0_i32 = arith.constant 0 : i32
    %c0_i32_0 = arith.constant 0 : i32
    %c0_i32_1 = arith.constant 0 : i32
    return %c0_i32, %c0_i32_0 : i32, i32
  }
  func.func @transform_5(%arg0: i32) -> (i32, i32) {
    %c0_i32 = arith.constant 0 : i32
    %c0_i32_0 = arith.constant 0 : i32
    return %arg0, %c0_i32 : i32, i32
  }
}

</mosaic_0001>

<llo_original>
// kernel: tpu_custom_call.1
$region0: #{tpu_custom_call.1}
  #allocation0 [shape = 'u32[]', space=smem, size = 0x4, offset = 0x4, fixed_abs, tag = 'smem constant byte address 0x4 - core index']
  #allocation1 [shape = 'u32[72,128]{1,0:T(1,128)}', space=vmem, size = 0x9000, scoped, tag = 'internal scratch']
  %s0 = inlined_call_operand.hbm [shape: f32[16,256], index: 0, kind: input, shape index: {}]
  %s1 = inlined_call_operand.hbm [shape: bf16[256,128], index: 1, kind: input, shape index: {}]
  %s2 = inlined_call_operand.vmem [shape: f32[1,128], index: 2, kind: input, shape index: {}]
  %s3 = inlined_call_operand.vmem [shape: f32[1,128], index: 3, kind: input, shape index: {}]
  %s4 = inlined_call_operand.vmem [shape: f32[1,128], index: 4, kind: input, shape index: {}]
  %s5 = inlined_call_operand.hbm [shape: f32[16,128], index: 5, kind: output, shape index: {}]
  %s6 = sld [smem:[#allocation0]]
  $region38: #{tpu_custom_call.1} parent=0
    _
  %s8 = ssub.s32 1, %s6
  %s9 = scalar_select 0, %s8, %s6
  $region1: #{tpu_custom_call.1} parent=0
    #allocation2 [shape = 'u8[16384]{0}', space=vmem, size = 0x4000, scoped, tag = 'input window, operand 0, single buffered']
    #allocation3 [shape = 's32[1]{0}', space=sflag, size = 0x4, scoped, tag = 'scoped memory for tpu_custom_call.1']
    #allocation4 [shape = 's32[1]{0}', space=sflag, size = 0x4, scoped, tag = 'scoped memory for tpu_custom_call.1']
    #allocation5 [shape = 'u8[65536]{0}', space=vmem, size = 0x10000, scoped, tag = 'input window, operand 1, single buffered']
    #allocation6 [shape = 's32[1]{0}', space=sflag, size = 0x4, scoped, tag = 'scoped memory for tpu_custom_call.1']
    #allocation7 [shape = 'u8[8192]{0}', space=vmem, size = 0x2000, scoped, tag = 'output window, operand 0, single buffered']
    %10 = vsyncpa [#allocation3], 0
    %11 = vsyncpa [#allocation6], 0
    %12 = vsyncpa [#allocation4], 0
    // Predicated region
    $region2: #{tpu_custom_call.1} parent=1 // pred_check
      _
    $region3: #{tpu_custom_call.1} parent=1 // pred_check_branch
      %14 = sbr.rel (0) target = $region5
    $region4: #{tpu_custom_call.1} parent=1 // pred_region
      %16 = vsyncadd [#allocation3], 0
      %s17 = sshll.u32 %s0, 4
      %s18 = int_to_ptr.hbm [resolvable:$true] %s17
      %s19 = sshll.u32 [#allocation2], 4
      %s20 = int_to_ptr.vmem [resolvable:$true] %s19
      %25 = dma.hbm_to_vmem [thread:$0]  %s18, 512, %s20, [#allocation3], 256, 256, 16
    $region5: #{tpu_custom_call.1} parent=1 // pred_fallthru
      _
    // Predicated region
    $region6: #{tpu_custom_call.1} parent=1 // pred_check
      _
    $region7: #{tpu_custom_call.1} parent=1 // pred_check_branch
      %27 = sbr.rel (0) target = $region9
    $region8: #{tpu_custom_call.1} parent=1 // pred_region
      %29 = vsyncadd [#allocation6], 0
      %s30 = sshll.u32 %s1, 4
      %s31 = int_to_ptr.hbm [resolvable:$true] %s30
      %s32 = sshll.u32 [#allocation5], 4
      %s33 = int_to_ptr.vmem [resolvable:$true] %s32
      %38 = dma.hbm_to_vmem [thread:$0]  %s31, 2048, %s33, [#allocation6], 64, 64, 4
    $region9: #{tpu_custom_call.1} parent=1 // pred_fallthru
      _
    // Predicated region
    $region10: #{tpu_custom_call.1} parent=1 // pred_check
      _
    $region11: #{tpu_custom_call.1} parent=1 // pred_check_branch
      %40 = sbr.rel (0) target = $region13
    $region12: #{tpu_custom_call.1} parent=1 // pred_region
      _
    $region13: #{tpu_custom_call.1} parent=1 // pred_fallthru
      _
    // Predicated region
    $region14: #{tpu_custom_call.1} parent=1 // pred_check
      _
    $region15: #{tpu_custom_call.1} parent=1 // pred_check_branch
      %42 = sbr.rel (0) target = $region17
    $region16: #{tpu_custom_call.1} parent=1 // pred_region
      _
    $region17: #{tpu_custom_call.1} parent=1 // pred_fallthru
      _
    // Predicated region
    $region18: #{tpu_custom_call.1} parent=1 // pred_check
      _
    $region19: #{tpu_custom_call.1} parent=1 // pred_check_branch
      %44 = sbr.rel (0) target = $region21
    $region20: #{tpu_custom_call.1} parent=1 // pred_region
      _
    $region21: #{tpu_custom_call.1} parent=1 // pred_fallthru
      _
    // Predicated region
    $region22: #{tpu_custom_call.1} parent=1 // pred_check
      _
    $region23: #{tpu_custom_call.1} parent=1 // pred_check_branch
      %46 = sbr.rel (0) target = $region25
    $region24: #{tpu_custom_call.1} parent=1 // pred_region
      %48 = dma.done [#allocation3], 512
    $region25: #{tpu_custom_call.1} parent=1 // pred_fallthru
      _
    // Predicated region
    $region26: #{tpu_custom_call.1} parent=1 // pred_check
      _
    $region27: #{tpu_custom_call.1} parent=1 // pred_check_branch
      %50 = sbr.rel (0) target = $region29
    $region28: #{tpu_custom_call.1} parent=1 // pred_region
      %52 = dma.done [#allocation6], 2048
    $region29: #{tpu_custom_call.1} parent=1 // pred_fallthru
      _
    %v53 = vld [vmem:[#allocation2] sm:$0xff]
    %v54 = vld [vmem:[#allocation2 + $0x8] sm:$0xff]
    %v55 = vld [vmem:[#allocation2 + $0x10] sm:$0xff]
    %v56 = vld [vmem:[#allocation2 + $0x18] sm:$0xff]
    %v57 = vld [vmem:[#allocation5] sm:$0xf]
    %v58 = vld [vmem:[#allocation5 + $0x4] sm:$0xf]
    %v59 = vld [vmem:[#allocation5 + $0x8] sm:$0xf]
    %v60 = vld [vmem:[#allocation5 + $0xc] sm:$0xf]
    %v61 = vld [vmem:[#allocation5 + $0x10] sm:$0xf]
    %v62 = vld [vmem:[#allocation5 + $0x14] sm:$0xf]
    %v63 = vld [vmem:[#allocation5 + $0x18] sm:$0xf]
    %v64 = vld [vmem:[#allocation5 + $0x1c] sm:$0xf]
    %v65 = vld [vmem:[#allocation5 + $0x20] sm:$0xf]
    %v66 = vld [vmem:[#allocation5 + $0x24] sm:$0xf]
    %v67 = vld [vmem:[#allocation5 + $0x28] sm:$0xf]
    %v68 = vld [vmem:[#allocation5 + $0x2c] sm:$0xf]
    %v69 = vld [vmem:[#allocation5 + $0x30] sm:$0xf]
    %v70 = vld [vmem:[#allocation5 + $0x34] sm:$0xf]
    %v71 = vld [vmem:[#allocation5 + $0x38] sm:$0xf]
    %v72 = vld [vmem:[#allocation5 + $0x3c] sm:$0xf]
    %v73 = vld [vmem:[#allocation5 + $0x40] sm:$0xf]
    %v74 = vld [vmem:[#allocation5 + $0x44] sm:$0xf]
    %v75 = vld [vmem:[#allocation5 + $0x48] sm:$0xf]
    %v76 = vld [vmem:[#allocation5 + $0x4c] sm:$0xf]
    %v77 = vld [vmem:[#allocation5 + $0x50] sm:$0xf]
    %v78 = vld [vmem:[#allocation5 + $0x54] sm:$0xf]
    %v79 = vld [vmem:[#allocation5 + $0x58] sm:$0xf]
    %v80 = vld [vmem:[#allocation5 + $0x5c] sm:$0xf]
    %v81 = vld [vmem:[#allocation5 + $0x60] sm:$0xf]
    %v82 = vld [vmem:[#allocation5 + $0x64] sm:$0xf]
    %v83 = vld [vmem:[#allocation5 + $0x68] sm:$0xf]
    %v84 = vld [vmem:[#allocation5 + $0x6c] sm:$0xf]
    %v85 = vld [vmem:[#allocation5 + $0x70] sm:$0xf]
    %v86 = vld [vmem:[#allocation5 + $0x74] sm:$0xf]
    %v87 = vld [vmem:[#allocation5 + $0x78] sm:$0xf]
    %v88 = vld [vmem:[#allocation5 + $0x7c] sm:$0xf]
    %v89 = vunpack.c.l.bf16 %v57
    %v90 = vunpack.c.l.bf16 %v58
    %v91 = vunpack.c.l.bf16 %v59
    %v92 = vunpack.c.l.bf16 %v60
    %v93 = vunpack.c.l.bf16 %v61
    %v94 = vunpack.c.l.bf16 %v62
    %v95 = vunpack.c.l.bf16 %v63
    %v96 = vunpack.c.l.bf16 %v64
    %v97 = vunpack.c.l.bf16 %v65
    %v98 = vunpack.c.l.bf16 %v66
    %v99 = vunpack.c.l.bf16 %v67
    %v100 = vunpack.c.l.bf16 %v68
    %v101 = vunpack.c.l.bf16 %v69
    %v102 = vunpack.c.l.bf16 %v70
    %v103 = vunpack.c.l.bf16 %v71
    %v104 = vunpack.c.l.bf16 %v72
    %v105 = vunpack.c.l.bf16 %v73
    %v106 = vunpack.c.l.bf16 %v74
    %v107 = vunpack.c.l.bf16 %v75
    %v108 = vunpack.c.l.bf16 %v76
    %v109 = vunpack.c.l.bf16 %v77
    %v110 = vunpack.c.l.bf16 %v78
    %v111 = vunpack.c.l.bf16 %v79
    %v112 = vunpack.c.l.bf16 %v80
    %v113 = vunpack.c.l.bf16 %v81
    %v114 = vunpack.c.l.bf16 %v82
    %v115 = vunpack.c.l.bf16 %v83
    %v116 = vunpack.c.l.bf16 %v84
    %v117 = vunpack.c.l.bf16 %v85
    %v118 = vunpack.c.l.bf16 %v86
    %v119 = vunpack.c.l.bf16 %v87
    %v120 = vunpack.c.l.bf16 %v88
    %v121 = vld [vmem:[%s2] sm:$0x1]
    %v123 = vperm.slane %v121, 0
    %125 = vmatpush.msra.mxu0 %v104
    %126 = vmatpush.msra.mxu0 %v103
    %127 = vmatpush.msra.mxu0 %v102
    %128 = vmatpush.msra.mxu0 %v101
    %129 = vmatpush.msra.mxu0 %v100
    %130 = vmatpush.msra.mxu0 %v99
    %131 = vmatpush.msra.mxu0 %v98
    %132 = vmatpush.msra.mxu0 %v97
    %133 = vmatpush.msra.mxu0 %v96
    %134 = vmatpush.msra.mxu0 %v95
    %135 = vmatpush.msra.mxu0 %v94
    %136 = vmatpush.msra.mxu0 %v93
    %137 = vmatpush.msra.mxu0 %v92
    %138 = vmatpush.msra.mxu0 %v91
    %139 = vmatpush.msra.mxu0 %v90
    %140 = vmatpush.msra.mxu0 %v89
    %141 = vmatmul.f32.gmra.mxu0 %v53
    %v142 = vpop.f32.mrf.mxu0
    %v143 = vadd.f32 %v123, %v142
    %144 = vmatmul.f32.gmra.mxu0 %v55
    %v145 = vpop.f32.mrf.mxu0
    %v146 = vadd.f32 %v123, %v145
    %147 = vdwg.mxu0
    %148 = vmatpush.msra.mxu0 %v120
    %149 = vmatpush.msra.mxu0 %v119
    %150 = vmatpush.msra.mxu0 %v118
    %151 = vmatpush.msra.mxu0 %v117
    %152 = vmatpush.msra.mxu0 %v116
    %153 = vmatpush.msra.mxu0 %v115
    %154 = vmatpush.msra.mxu0 %v114
    %155 = vmatpush.msra.mxu0 %v113
    %156 = vmatpush.msra.mxu0 %v112
    %157 = vmatpush.msra.mxu0 %v111
    %158 = vmatpush.msra.mxu0 %v110
    %159 = vmatpush.msra.mxu0 %v109
    %160 = vmatpush.msra.mxu0 %v108
    %161 = vmatpush.msra.mxu0 %v107
    %162 = vmatpush.msra.mxu0 %v106
    %163 = vmatpush.msra.mxu0 %v105
    %164 = vmatmul.f32.gmra.mxu0 %v54
    %v165 = vpop.f32.mrf.mxu0
    %v166 = vadd.f32 %v143, %v165
    %167 = vmatmul.f32.gmra.mxu0 %v56
    %v168 = vpop.f32.mrf.mxu0
    %v169 = vadd.f32 %v146, %v168
    %170 = vdwg.mxu0
    %171 = vadd.xlane.f32.xlu0 %v166
    %v172 = vpop.xlane.xlu0 %171
    %173 = vadd.xlane.f32.xlu0 %v169
    %v174 = vpop.xlane.xlu0 %173
    %v175 = vrcp.pop 128.0
    %v176 = vmul.f32 128.0, %v175
    %v177 = vsub.f32 1.0, %v176
    %v178 = vmul.f32 %v175, %v177
    %v179 = vadd.f32 %v175, %v178
    %vm180 = vweird.f32 %v175
    %v181 = vsel %vm180, %v175, %v179
    %v182 = vmul.f32 %v172, %v181
    %v183 = vmul.f32 %v174, %v181
    %v184 = vsub.f32 %v166, %v182
    %v185 = vsub.f32 %v169, %v183
    %v186 = vmul.f32 %v184, %v184
    %v187 = vmul.f32 %v185, %v185
    %188 = vadd.xlane.f32.xlu0 %v186
    %v189 = vpop.xlane.xlu0 %188
    %190 = vadd.xlane.f32.xlu0 %v187
    %v191 = vpop.xlane.xlu0 %190
    %v192 = vmul.f32 %v189, %v181
    %v193 = vmul.f32 %v191, %v181
    %v194 = vadd.f32 %v192, 1e-12
    %v195 = vadd.f32 %v193, 1e-12
    %v196 = vrsqrt.pop %v194
    %v197 = vmul.f32 %v196, %v194
    %v198 = vmul.f32 %v197, %v196
    %v199 = vmul.f32 0.5, %v198
    %v200 = vsub.f32 1.5, %v199
    %v201 = vmul.f32 %v196, %v200
    %vm202 = vweird.f32 %v194
    %vm203 = vweird.f32 %v196
    %vm204 = vmor %vm202, %vm203
    %v205 = vsel %vm204, %v196, %v201
    %v206 = vrsqrt.pop %v195
    %v207 = vmul.f32 %v206, %v195
    %v208 = vmul.f32 %v207, %v206
    %v209 = vmul.f32 0.5, %v208
    %v210 = vsub.f32 1.5, %v209
    %v211 = vmul.f32 %v206, %v210
    %vm212 = vweird.f32 %v195
    %vm213 = vweird.f32 %v206
    %vm214 = vmor %vm212, %vm213
    %v215 = vsel %vm214, %v206, %v211
    %v216 = vld [vmem:[%s3] sm:$0x1]
    %v218 = vperm.slane %v216, 0
    %v220 = vmul.f32 %v205, %v218
    %v221 = vmul.f32 %v215, %v218
    %v222 = vmul.f32 %v184, %v220
    %v223 = vmul.f32 %v185, %v221
    %v224 = vld [vmem:[%s4] sm:$0x1]
    %v226 = vperm.slane %v224, 0
    %v228 = vadd.f32 %v222, %v226
    %v229 = vadd.f32 %v223, %v226
    %230 = vst [vmem:[#allocation7] sm:$0xff] %v228
    %231 = vst [vmem:[#allocation7 + $0x8] sm:$0xff] %v229
    // Predicated region
    $region30: #{tpu_custom_call.1} parent=1 // pred_check
      _
    $region31: #{tpu_custom_call.1} parent=1 // pred_check_branch
      %233 = sbr.rel (0) target = $region33
    $region32: #{tpu_custom_call.1} parent=1 // pred_region
      %235 = vsyncadd [#allocation4], 0
      %s236 = sshll.u32 [#allocation7], 4
      %s237 = int_to_ptr.vmem [resolvable:$true] %s236
      %s238 = sshll.u32 %s5, 4
      %s239 = int_to_ptr.hbm [resolvable:$true] %s238
      %244 = dma.vmem_to_hbm [thread:$0]  %s237, 256, %s239, [#allocation4], 128, 128, 8
    $region33: #{tpu_custom_call.1} parent=1 // pred_fallthru
      _
    // Predicated region
    $region34: #{tpu_custom_call.1} parent=1 // pred_check
      _
    $region35: #{tpu_custom_call.1} parent=1 // pred_check_branch
      %246 = sbr.rel (0) target = $region37
    $region36: #{tpu_custom_call.1} parent=1 // pred_region
      %248 = dma.done [#allocation4], 256
    $region37: #{tpu_custom_call.1} parent=1 // pred_fallthru
      _
    %249 = vsyncpa [#allocation3], 1
    %250 = vsyncpa [#allocation6], 1
    %251 = vsyncpa [#allocation4], 1

</llo_original>
